<compile_context>
chip_gen: v7x
topology: tpu7x:2x2x1
jax: 0.10.0
libtpu: 0.0.40
codegen_flags: <defaults>
</compile_context>

<pallas_src>
import jax
import jax.numpy as jnp
from jax.experimental import pallas as pl
from jax.experimental.pallas import tpu as pltpu


def gab_kernel(x_ref, w1t_ref, b1_ref, w2t_ref, b2_ref, o_ref):
    # x_ref / o_ref: (Nb, HW, C) -- channels on the lane (last) axis.
    x = x_ref[...]                                    # native dtype, no full-slab cast

    # Global average pool over the spatial (sublane) axis, accumulated in f32.
    z = jnp.mean(x, axis=1, dtype=jnp.float32)        # (Nb, C)

    # Excitation MLP: (Nb, C) @ (C, Cr) -> relu -> (Nb, Cr) @ (Cr, C) -> sigmoid.
    h = jnp.dot(z, w1t_ref[...], preferred_element_type=jnp.float32) + b1_ref[...]
    h = jnp.maximum(h, 0.0)                           # (Nb, Cr)
    s = jnp.dot(h, w2t_ref[...], preferred_element_type=jnp.float32) + b2_ref[...]
    s = jax.nn.sigmoid(s)                             # (Nb, C)

    # Channel-wise gating: broadcast (Nb, 1, C) over HW rows, native dtype.
    gate = s.astype(x.dtype)
    o_ref[...] = (x * gate[:, None, :]).astype(o_ref.dtype)


def _pick_batch_block(n, hw, c, itemsize, vmem_block_budget=24 * 1024 * 1024):
    """Largest divisor of n whose in+out double-buffered blocks fit the budget,
    preferring >= 2 grid steps so both v7x TensorCores get work."""
    per_image = hw * c * itemsize
    # 2 arrays (in + out) x 2 pipeline buffers x Nb images.
    max_nb = max(1, int(vmem_block_budget // (4 * per_image)))
    divisors = [d for d in range(1, n + 1) if n % d == 0 and d <= max_nb]
    if not divisors:
        return 1
    multi = [d for d in divisors if n // d >= 2]
    return max(multi) if multi else max(divisors)


def gab_forward(x, w1, b1, w2, b2, *, vmem_limit_bytes=64 * 1024 * 1024):
    """GAB forward.

    x : (N, C, H, W)
    w1: (Cr, C)  1x1 conv1 weight (squeezed), b1: (Cr,)
    w2: (C, Cr)  1x1 conv2 weight (squeezed), b2: (C,)
    """
    N, C, H, W = x.shape
    Cr = w1.shape[0]
    HW = H * W
    itemsize = x.dtype.itemsize

    # Lane-dense layout: channels on the lane axis (layout plumbing in the wrapper).
    x2 = jnp.transpose(x, (0, 2, 3, 1)).reshape(N, HW, C)

    w1t = jnp.transpose(w1)          # (C, Cr)
    w2t = jnp.transpose(w2)          # (Cr, C)
    b1r = b1.reshape(1, Cr)
    b2r = b2.reshape(1, C)

    nb = _pick_batch_block(N, HW, C, itemsize)
    grid = (N // nb,)

    cost = pl.CostEstimate(
        flops=2 * N * C * Cr * 2 + 2 * N * C * HW,
        transcendentals=N * C,
        bytes_accessed=2 * N * C * HW * itemsize
        + (C * Cr * 2 + C + Cr) * w1.dtype.itemsize,
    )

    # TODO(synk): for feature maps where even a single (1, HW, C) slab exceeds the
    # VMEM budget, switch to a two-pass (pool/excite, then tiled gating) design.
    out = pl.pallas_call(
        gab_kernel,
        out_shape=jax.ShapeDtypeStruct((N, HW, C), x.dtype),
        grid_spec=pltpu.PrefetchScalarGridSpec(
            num_scalar_prefetch=0,
            grid=grid,
            in_specs=[
                pl.BlockSpec((nb, HW, C), lambda n: (n, 0, 0)),
                pl.BlockSpec((C, Cr), lambda n: (0, 0)),
                pl.BlockSpec((1, Cr), lambda n: (0, 0)),
                pl.BlockSpec((Cr, C), lambda n: (0, 0)),
                pl.BlockSpec((1, C), lambda n: (0, 0)),
            ],
            out_specs=pl.BlockSpec((nb, HW, C), lambda n: (n, 0, 0)),
        ),
        compiler_params=pltpu.CompilerParams(
            dimension_semantics=("parallel",),
            vmem_limit_bytes=vmem_limit_bytes,
        ),
        cost_estimate=cost,
    )(x2, w1t, b1r, w2t, b2r)

    return jnp.transpose(out.reshape(N, H, W, C), (0, 3, 1, 2))


def gab_reference(x, w1, b1, w2, b2):
    xf = x.astype(jnp.float32)
    z = jnp.mean(xf, axis=(2, 3))                      # (N, C)
    h = jnp.maximum(z @ w1.T + b1, 0.0)                # (N, Cr)
    s = jax.nn.sigmoid(h @ w2.T + b2)                  # (N, C)
    return (xf * s[:, :, None, None]).astype(x.dtype)


if __name__ == "__main__":
    key = jax.random.PRNGKey(0)

    # Test 1: N=2, C=16, 16x16 spatial, reduction=4.
    N, C, H, W = 2, 16, 16, 16
    Cr = C // 4
    kx, k1, kb1, k2, kb2, key = jax.random.split(key, 6)
    x = jax.random.normal(kx, (N, C, H, W), dtype=jnp.float32)
    w1 = jax.random.normal(k1, (Cr, C), dtype=jnp.float32) * 0.1
    b1 = jax.random.normal(kb1, (Cr,), dtype=jnp.float32) * 0.1
    w2 = jax.random.normal(k2, (C, Cr), dtype=jnp.float32) * 0.1
    b2 = jax.random.normal(kb2, (C,), dtype=jnp.float32) * 0.1

    out = gab_forward(x, w1, b1, w2, b2)
    jax.block_until_ready(out)
    ref = gab_reference(x, w1, b1, w2, b2)
    assert out.shape == (N, C, H, W)
    assert jnp.allclose(out, ref, atol=1e-5, rtol=1e-5)

    # Test 2: larger batch so Nb > 1 is exercised (N=4, C=16, 8x8).
    N2, C2, H2, W2 = 4, 16, 8, 8
    Cr2 = C2 // 4
    kx, k1, kb1, k2, kb2, key = jax.random.split(key, 6)
    x2 = jax.random.normal(kx, (N2, C2, H2, W2), dtype=jnp.float32)
    w1b = jax.random.normal(k1, (Cr2, C2), dtype=jnp.float32) * 0.1
    b1b = jax.random.normal(kb1, (Cr2,), dtype=jnp.float32) * 0.1
    w2b = jax.random.normal(k2, (C2, Cr2), dtype=jnp.float32) * 0.1
    b2b = jax.random.normal(kb2, (C2,), dtype=jnp.float32) * 0.1

    out2 = gab_forward(x2, w1b, b1b, w2b, b2b)
    jax.block_until_ready(out2)
    ref2 = gab_reference(x2, w1b, b1b, w2b, b2b)
    assert jnp.allclose(out2, ref2, atol=1e-5, rtol=1e-5)

    print("KERNEL_OK")
</pallas_src>

<mosaic_0001>
module attributes {stable_mosaic.version = 11 : i64} {
  func.func @gab_kernel(%arg0: i32, %arg1: memref<1x256x16xf32, #tpu.memory_space<vmem>>, %arg2: memref<16x4xf32, #tpu.memory_space<vmem>>, %arg3: memref<1x4xf32, #tpu.memory_space<vmem>>, %arg4: memref<4x16xf32, #tpu.memory_space<vmem>>, %arg5: memref<1x16xf32, #tpu.memory_space<vmem>>, %arg6: memref<1x256x16xf32, #tpu.memory_space<vmem>>) attributes {dimension_semantics = [#tpu.dimension_semantics<parallel>], iteration_bounds = array<i64: 2>, scalar_prefetch = 0 : i64, scratch_operands = 0 : i64, tpu.core_type = #tpu.core_type<tc>, window_params = [{transform_indices = @transform_0, window_bounds = array<i64: 1, 256, 16>}, {pipeline_mode = #tpu.pipeline_mode<synchronous>, transform_indices = @transform_1, window_bounds = array<i64: 16, 4>}, {pipeline_mode = #tpu.pipeline_mode<synchronous>, transform_indices = @transform_2, window_bounds = array<i64: 1, 4>}, {pipeline_mode = #tpu.pipeline_mode<synchronous>, transform_indices = @transform_3, window_bounds = array<i64: 4, 16>}, {pipeline_mode = #tpu.pipeline_mode<synchronous>, transform_indices = @transform_4, window_bounds = array<i64: 1, 16>}, {transform_indices = @transform_5, window_bounds = array<i64: 1, 256, 16>}]} {
    %c0 = arith.constant 0 : index
    %c0_0 = arith.constant 0 : index
    %c0_1 = arith.constant 0 : index
    %0 = vector.load %arg1[%c0, %c0_0, %c0_1] : memref<1x256x16xf32, #tpu.memory_space<vmem>>, vector<1x256x16xf32>
    %cst = arith.constant dense<0.000000e+00> : vector<1x16xf32>
    %1 = vector.multi_reduction <add>, %0, %cst [1] : vector<1x256x16xf32> to vector<1x16xf32>
    %cst_2 = arith.constant 2.560000e+02 : f32
    %2 = vector.broadcast %cst_2 : f32 to vector<1x16xf32>
    %3 = arith.divf %1, %2 : vector<1x16xf32>
    %c0_3 = arith.constant 0 : index
    %c0_4 = arith.constant 0 : index
    %4 = vector.load %arg2[%c0_3, %c0_4] : memref<16x4xf32, #tpu.memory_space<vmem>>, vector<16x4xf32>
    %cst_5 = arith.constant dense<0.000000e+00> : vector<1x4xf32>
    %5 = tpu.matmul %3, %4, %cst_5 {dimension_numbers = #tpu.dot_dimension_numbers<[1], [0], [0], [1], [0, 0, 1, 1], [], []>} : vector<1x16xf32>, vector<16x4xf32>, vector<1x4xf32> -> vector<1x4xf32>
    %c0_6 = arith.constant 0 : index
    %c0_7 = arith.constant 0 : index
    %6 = vector.load %arg3[%c0_6, %c0_7] : memref<1x4xf32, #tpu.memory_space<vmem>>, vector<1x4xf32>
    %7 = arith.addf %5, %6 : vector<1x4xf32>
    %cst_8 = arith.constant 0.000000e+00 : f32
    %8 = vector.broadcast %cst_8 : f32 to vector<1x4xf32>
    %9 = arith.maximumf %7, %8 : vector<1x4xf32>
    %c0_9 = arith.constant 0 : index
    %c0_10 = arith.constant 0 : index
    %10 = vector.load %arg4[%c0_9, %c0_10] : memref<4x16xf32, #tpu.memory_space<vmem>>, vector<4x16xf32>
    %cst_11 = arith.constant dense<0.000000e+00> : vector<1x16xf32>
    %11 = tpu.matmul %9, %10, %cst_11 {dimension_numbers = #tpu.dot_dimension_numbers<[1], [0], [0], [1], [0, 0, 1, 1], [], []>} : vector<1x4xf32>, vector<4x16xf32>, vector<1x16xf32> -> vector<1x16xf32>
    %c0_12 = arith.constant 0 : index
    %c0_13 = arith.constant 0 : index
    %12 = vector.load %arg5[%c0_12, %c0_13] : memref<1x16xf32, #tpu.memory_space<vmem>>, vector<1x16xf32>
    %13 = arith.addf %11, %12 : vector<1x16xf32>
    %14 = arith.negf %13 : vector<1x16xf32>
    %15 = math.exp %14 : vector<1x16xf32>
    %cst_14 = arith.constant 1.000000e+00 : f32
    %16 = vector.broadcast %cst_14 : f32 to vector<1x16xf32>
    %17 = arith.addf %16, %15 : vector<1x16xf32>
    %18 = arith.divf %16, %17 : vector<1x16xf32>
    %19 = vector.shape_cast %18 : vector<1x16xf32> to vector<1x1x16xf32>
    %20 = vector.broadcast %19 : vector<1x1x16xf32> to vector<1x256x16xf32>
    %21 = arith.mulf %0, %20 : vector<1x256x16xf32>
    %c0_15 = arith.constant 0 : index
    %c0_16 = arith.constant 0 : index
    %c0_17 = arith.constant 0 : index
    %22 = vector.load %arg6[%c0_15, %c0_16, %c0_17] : memref<1x256x16xf32, #tpu.memory_space<vmem>>, vector<1x256x16xf32>
    tpu.vector_store %arg6[%c0_15, %c0_16, %c0_17], %21 {strides = array<i32>} : memref<1x256x16xf32, #tpu.memory_space<vmem>>, vector<1x256x16xf32>,
    return
  }
  func.func @transform_0(%arg0: i32) -> (i32, i32, i32) {
    %c0_i32 = arith.constant 0 : i32
    %c0_i32_0 = arith.constant 0 : i32
    %c0_i32_1 = arith.constant 0 : i32
    return %arg0, %c0_i32, %c0_i32_0 : i32, i32, i32
  }
  func.func @transform_1(%arg0: i32) -> (i32, i32) {
    %c0_i32 = arith.constant 0 : i32
    %c0_i32_0 = arith.constant 0 : i32
    %c0_i32_1 = arith.constant 0 : i32
    return %c0_i32, %c0_i32_0 : i32, i32
  }
  func.func @transform_2(%arg0: i32) -> (i32, i32) {
    %c0_i32 = arith.constant 0 : i32
    %c0_i32_0 = arith.constant 0 : i32
    %c0_i32_1 = arith.constant 0 : i32
    return %c0_i32, %c0_i32_0 : i32, i32
  }
  func.func @transform_3(%arg0: i32) -> (i32, i32) {
    %c0_i32 = arith.constant 0 : i32
    %c0_i32_0 = arith.constant 0 : i32
    %c0_i32_1 = arith.constant 0 : i32
    return %c0_i32, %c0_i32_0 : i32, i32
  }
  func.func @transform_4(%arg0: i32) -> (i32, i32) {
    %c0_i32 = arith.constant 0 : i32
    %c0_i32_0 = arith.constant 0 : i32
    %c0_i32_1 = arith.constant 0 : i32
    return %c0_i32, %c0_i32_0 : i32, i32
  }
  func.func @transform_5(%arg0: i32) -> (i32, i32, i32) {
    %c0_i32 = arith.constant 0 : i32
    %c0_i32_0 = arith.constant 0 : i32
    %c0_i32_1 = arith.constant 0 : i32
    return %arg0, %c0_i32, %c0_i32_0 : i32, i32, i32
  }
}

</mosaic_0001>

<llo_original>
// kernel: tpu_custom_call.1
$region0: #{tpu_custom_call.1}
  #allocation0 [shape = 'u32[]', space=smem, size = 0x4, offset = 0x4, fixed_abs, tag = 'smem constant byte address 0x4 - core index']
  #allocation1 [shape = 'u32[144,128]{1,0:T(1,128)}', space=vmem, size = 0x12000, scoped, tag = 'internal scratch']
  %s0 = inlined_call_operand.hbm [shape: f32[2,256,16], index: 0, kind: input, shape index: {}]
  %s1 = inlined_call_operand.hbm [shape: f32[16,4], index: 1, kind: input, shape index: {}]
  %s2 = inlined_call_operand.hbm [shape: f32[1,4], index: 2, kind: input, shape index: {}]
  %s3 = inlined_call_operand.hbm [shape: f32[4,16], index: 3, kind: input, shape index: {}]
  %s4 = inlined_call_operand.hbm [shape: f32[1,16], index: 4, kind: input, shape index: {}]
  %s5 = inlined_call_operand.hbm [shape: f32[2,256,16], index: 5, kind: output, shape index: {}]
  %s6 = sld [smem:[#allocation0]]
  $region73: #{tpu_custom_call.1} parent=0
    _
  %s8 = ssub.s32 1, %s6
  %s9 = scalar_select 0, %s8, %s6
  $region1: #{tpu_custom_call.1} parent=0
    #allocation2 [shape = 'u8[262144]{0}', space=vmem, size = 0x40000, scoped, tag = 'input window, operand 0']
    #allocation3 [shape = 's32[2]{0}', space=sflag, size = 0x8, scoped, tag = 'scoped memory for tpu_custom_call.1']
    #allocation4 [shape = 's32[2]{0}', space=sflag, size = 0x8, scoped, tag = 'scoped memory for tpu_custom_call.1']
    #allocation5 [shape = 'u8[8192]{0}', space=vmem, size = 0x2000, scoped, tag = 'input window, operand 1, single buffered']
    #allocation6 [shape = 's32[1]{0}', space=sflag, size = 0x4, scoped, tag = 'scoped memory for tpu_custom_call.1']
    #allocation7 [shape = 'u8[512]{0}', space=vmem, size = 0x400, scoped, tag = 'input window, operand 2, single buffered']
    #allocation8 [shape = 'u8[2048]{0}', space=vmem, size = 0x800, scoped, tag = 'input window, operand 3, single buffered']
    #allocation9 [shape = 's32[1]{0}', space=sflag, size = 0x4, scoped, tag = 'scoped memory for tpu_custom_call.1']
    #allocation10 [shape = 'u8[512]{0}', space=vmem, size = 0x400, scoped, tag = 'input window, operand 4, single buffered']
    #allocation11 [shape = 'u8[262144]{0}', space=vmem, size = 0x40000, scoped, tag = 'output window, operand 0']
    %10 = vsyncpa [#allocation3], 0
    %s11 = scalar_lea.sflag [#allocation3], 1
    %12 = vsyncpa %s11, 0
    %13 = vsyncpa [#allocation6], 0
    %14 = vsyncpa [#allocation9], 0
    %15 = vsyncpa [#allocation4], 0
    %s16 = scalar_lea.sflag [#allocation4], 1
    %17 = vsyncpa %s16, 0
    loop: start=0, step=1, limit=4
    $region2: #{tpu_custom_call.1} parent=1 // loop_pre_header
      _
    $region3: #{tpu_custom_call.1} parent=1 // loop_header
      %s19 = sphi 0, %s23
      %p20 = scmp.ge.s32.totalorder %s19, 4
      %s29 = sphi 0, %s31
      %s32 = sphi 0, %s29
      %s33 = sphi 0, %s32
      %s49 = sphi 0, %s33
      %s53 = sphi 0, %s53
      %s55 = sphi 0, %s53
      %s56 = sphi 0, %s55
      %s70 = sphi 0, %s56
      %s74 = sphi 0, %s74
      %s76 = sphi 0, %s74
      %s77 = sphi 0, %s76
      %s91 = sphi 0, %s77
      %s95 = sphi 0, %s95
      %s97 = sphi 0, %s95
      %s98 = sphi 0, %s97
      %s112 = sphi 0, %s98
      %s116 = sphi 0, %s116
      %s118 = sphi 0, %s116
      %s119 = sphi 0, %s118
      %s133 = sphi 0, %s119
      %s139 = sphi 0, %s141
      %s142 = sphi 0, %s139
      %s143 = sphi 0, %s142
      %s159 = sphi 0, %s143
    $region4: #{tpu_custom_call.1} parent=1 // loop_header_branch
      %22 = sbr.rel (%p20) target = $region8
    $region5: #{tpu_custom_call.1} parent=1 // loop_body
      %s24 = ssub.s32 %s19, 1
      %s25 = ssub.s32 %s19, 2
      %s26 = sadd.s32 %s19, 1
      %s27 = ssub.s32 %s19, %s26
      %p28 = scmp.eq.s32.totalorder %s27, 0
      %s30 = sadd.s32 %s29, 1
      %s31 = scalar_select %p28, %s29, %s30
      %p34 = pneg %p28
      %p35 = scmp.eq.s32.totalorder %s19, 1
      %p36 = por %p34, %p35
      %p37 = scmp.ne.s32.totalorder %s29, %s32
      %p38 = scmp.eq.s32.totalorder %s19, 0
      %p39 = por %p37, %p38
      %p40 = scmp.ne.s32.totalorder %s29, %s32
      %p41 = scmp.eq.s32.totalorder %s24, 1
      %p42 = por %p40, %p41
      %p43 = scmp.ne.s32.totalorder %s32, %s33
      %p44 = scmp.eq.s32.totalorder %s24, 0
      %p45 = por %p43, %p44
      %p46 = scmp.ne.s32.totalorder %s32, %s33
      %p47 = scmp.eq.s32.totalorder %s25, 1
      %p48 = por %p46, %p47
      %p50 = scmp.ne.s32.totalorder %s33, %s49
      %p51 = scmp.eq.s32.totalorder %s25, 0
      %p52 = por %p50, %p51
      %s54 = sadd.s32 %s53, 1
      %p57 = scmp.eq.s32.totalorder %s19, 1
      %p58 = scmp.ne.s32.totalorder %s53, %s55
      %p59 = scmp.eq.s32.totalorder %s19, 0
      %p60 = por %p58, %p59
      %p61 = scmp.ne.s32.totalorder %s53, %s55
      %p62 = scmp.eq.s32.totalorder %s24, 1
      %p63 = por %p61, %p62
      %p64 = scmp.ne.s32.totalorder %s55, %s56
      %p65 = scmp.eq.s32.totalorder %s24, 0
      %p66 = por %p64, %p65
      %p67 = scmp.ne.s32.totalorder %s55, %s56
      %p68 = scmp.eq.s32.totalorder %s25, 1
      %p69 = por %p67, %p68
      %p71 = scmp.ne.s32.totalorder %s56, %s70
      %p72 = scmp.eq.s32.totalorder %s25, 0
      %p73 = por %p71, %p72
      %s75 = sadd.s32 %s74, 1
      %p78 = scmp.eq.s32.totalorder %s19, 1
      %p79 = scmp.ne.s32.totalorder %s74, %s76
      %p80 = scmp.eq.s32.totalorder %s19, 0
      %p81 = por %p79, %p80
      %p82 = scmp.ne.s32.totalorder %s74, %s76
      %p83 = scmp.eq.s32.totalorder %s24, 1
      %p84 = por %p82, %p83
      %p85 = scmp.ne.s32.totalorder %s76, %s77
      %p86 = scmp.eq.s32.totalorder %s24, 0
      %p87 = por %p85, %p86
      %p88 = scmp.ne.s32.totalorder %s76, %s77
      %p89 = scmp.eq.s32.totalorder %s25, 1
      %p90 = por %p88, %p89
      %p92 = scmp.ne.s32.totalorder %s77, %s91
      %p93 = scmp.eq.s32.totalorder %s25, 0
      %p94 = por %p92, %p93
      %s96 = sadd.s32 %s95, 1
      %p99 = scmp.eq.s32.totalorder %s19, 1
      %p100 = scmp.ne.s32.totalorder %s95, %s97
      %p101 = scmp.eq.s32.totalorder %s19, 0
      %p102 = por %p100, %p101
      %p103 = scmp.ne.s32.totalorder %s95, %s97
      %p104 = scmp.eq.s32.totalorder %s24, 1
      %p105 = por %p103, %p104
      %p106 = scmp.ne.s32.totalorder %s97, %s98
      %p107 = scmp.eq.s32.totalorder %s24, 0
      %p108 = por %p106, %p107
      %p109 = scmp.ne.s32.totalorder %s97, %s98
      %p110 = scmp.eq.s32.totalorder %s25, 1
      %p111 = por %p109, %p110
      %p113 = scmp.ne.s32.totalorder %s98, %s112
      %p114 = scmp.eq.s32.totalorder %s25, 0
      %p115 = por %p113, %p114
      %s117 = sadd.s32 %s116, 1
      %p120 = scmp.eq.s32.totalorder %s19, 1
      %p121 = scmp.ne.s32.totalorder %s116, %s118
      %p122 = scmp.eq.s32.totalorder %s19, 0
      %p123 = por %p121, %p122
      %p124 = scmp.ne.s32.totalorder %s116, %s118
      %p125 = scmp.eq.s32.totalorder %s24, 1
      %p126 = por %p124, %p125
      %p127 = scmp.ne.s32.totalorder %s118, %s119
      %p128 = scmp.eq.s32.totalorder %s24, 0
      %p129 = por %p127, %p128
      %p130 = scmp.ne.s32.totalorder %s118, %s119
      %p131 = scmp.eq.s32.totalorder %s25, 1
      %p132 = por %p130, %p131
      %p134 = scmp.ne.s32.totalorder %s119, %s133
      %p135 = scmp.eq.s32.totalorder %s25, 0
      %p136 = por %p134, %p135
      %s137 = ssub.s32 %s19, %s26
      %p138 = scmp.eq.s32.totalorder %s137, 0
      %s140 = sadd.s32 %s139, 1
      %s141 = scalar_select %p138, %s139, %s140
      %p144 = pneg %p138
      %p145 = scmp.eq.s32.totalorder %s19, 1
      %p146 = por %p144, %p145
      %p147 = scmp.ne.s32.totalorder %s139, %s142
      %p148 = scmp.eq.s32.totalorder %s19, 0
      %p149 = por %p147, %p148
      %p150 = scmp.ne.s32.totalorder %s139, %s142
      %p151 = scmp.eq.s32.totalorder %s24, 1
      %p152 = por %p150, %p151
      %p153 = scmp.ne.s32.totalorder %s142, %s143
      %p154 = scmp.eq.s32.totalorder %s24, 0
      %p155 = por %p153, %p154
      %p156 = scmp.ne.s32.totalorder %s142, %s143
      %p157 = scmp.eq.s32.totalorder %s25, 1
      %p158 = por %p156, %p157
      %p160 = scmp.ne.s32.totalorder %s143, %s159
      %p161 = scmp.eq.s32.totalorder %s25, 0
      %p162 = por %p160, %p161
      %p163 = scmp.le.s32.totalorder 1, %s19
      %p164 = scmp.lt.s32.totalorder %s19, 3
      %p165 = pnand %p163, %p164
      %p166 = pneg %p165
      // Predicated region
      $region9: #{tpu_custom_call.1} parent=5 // pred_check
        _
      $region10: #{tpu_custom_call.1} parent=5 // pred_check_branch
        %168 = sbr.rel (%p165) target = $region12
      $region11: #{tpu_custom_call.1} parent=5 // pred_region
        %s169 = ssub.s32 %s19, 1
        // Predicated region
        $region13: #{tpu_custom_call.1} parent=11 // pred_check
          %p170 = pneg %p66
        $region14: #{tpu_custom_call.1} parent=11 // pred_check_branch
          %172 = sbr.rel (%p170) target = $region16
        $region15: #{tpu_custom_call.1} parent=11 // pred_region
          %s174 = ssub.s32 256, 256
          %175 = vsyncadd [#allocation6], %s174
          %s176 = sshll.u32 [#allocation5], 4
          %s177 = int_to_ptr.vmem [resolvable:$true] %s176
          %182 = dma.hbm_to_vmem [thread:$0]  %s1, 256, %s177, [#allocation6], 128, 128, 8
        $region16: #{tpu_custom_call.1} parent=11 // pred_fallthru
          _
        // Predicated region
        $region17: #{tpu_custom_call.1} parent=11 // pred_check
          %p183 = pneg %p87
        $region18: #{tpu_custom_call.1} parent=11 // pred_check_branch
          %185 = sbr.rel (%p183) target = $region20
        $region19: #{tpu_custom_call.1} parent=11 // pred_region
          %s187 = ssub.s32 16, 16
          %188 = vsyncadd [#allocation6], %s187
          %s190 = sshll.u32 [#allocation7], 4
          %s191 = int_to_ptr.vmem [resolvable:$true] %s190
          %193 = dma.hbm_to_vmem [thread:$0]  %s2, 16, %s191, [#allocation6]
        $region20: #{tpu_custom_call.1} parent=11 // pred_fallthru
          _
        // Predicated region
        $region21: #{tpu_custom_call.1} parent=11 // pred_check
          %p194 = pneg %p108
        $region22: #{tpu_custom_call.1} parent=11 // pred_check_branch
          %196 = sbr.rel (%p194) target = $region24
        $region23: #{tpu_custom_call.1} parent=11 // pred_region
          %s198 = ssub.s32 64, 64
          %199 = vsyncadd [#allocation9], %s198
          %s201 = sshll.u32 [#allocation8], 4
          %s202 = int_to_ptr.vmem [resolvable:$true] %s201
          %204 = dma.hbm_to_vmem [thread:$0]  %s3, 64, %s202, [#allocation9]
        $region24: #{tpu_custom_call.1} parent=11 // pred_fallthru
          _
        // Predicated region
        $region25: #{tpu_custom_call.1} parent=11 // pred_check
          %p205 = pneg %p129
        $region26: #{tpu_custom_call.1} parent=11 // pred_check_branch
          %207 = sbr.rel (%p205) target = $region28
        $region27: #{tpu_custom_call.1} parent=11 // pred_region
          %s209 = ssub.s32 16, 16
          %210 = vsyncadd [#allocation9], %s209
          %s212 = sshll.u32 [#allocation10], 4
          %s213 = int_to_ptr.vmem [resolvable:$true] %s212
          %215 = dma.hbm_to_vmem [thread:$0]  %s4, 16, %s213, [#allocation9]
        $region28: #{tpu_custom_call.1} parent=11 // pred_fallthru
          _
      $region12: #{tpu_custom_call.1} parent=5 // pred_fallthru
        _
      %p216 = scmp.lt.s32.totalorder %s19, 2
      // Predicated region
      $region29: #{tpu_custom_call.1} parent=5 // pred_check
        %p217 = pneg %p216
      $region30: #{tpu_custom_call.1} parent=5 // pred_check_branch
        %219 = sbr.rel (%p217) target = $region32
      $region31: #{tpu_custom_call.1} parent=5 // pred_region
        // Predicated region
        $region33: #{tpu_custom_call.1} parent=31 // pred_check
          %p220 = pneg %p39
        $region34: #{tpu_custom_call.1} parent=31 // pred_check_branch
          %222 = sbr.rel (%p220) target = $region36
        $region35: #{tpu_custom_call.1} parent=31 // pred_region
          %s223 = sand.u32 %s29, 1
          %s224 = scalar_lea.sflag [#allocation3], %s223
          %s225 = sand.u32 %s29, 1
          %s226 = smul.addr %s225, 256
          %s227 = scalar_lea.vmem [#allocation2], %s226
          %s229 = ssub.s32 4096, 4096
          %230 = vsyncadd %s224, %s229
          %s231 = smul.addr %s19, 32
          %s232 = smul.addr %s231, 128
          %s233 = scalar_lea.hbm %s0, %s232
          %s234 = sshll.u32 %s227, 4
          %s235 = int_to_ptr.vmem [resolvable:$true] %s234
          %240 = dma.hbm_to_vmem [thread:$0]  %s233, 4096, %s235, %s224, 128, 128, 8
        $region36: #{tpu_custom_call.1} parent=31 // pred_fallthru
          _
      $region32: #{tpu_custom_call.1} parent=5 // pred_fallthru
        _
      %p241 = scmp.le.s32.totalorder 1, %s19
      %p242 = scmp.lt.s32.totalorder %s19, 3
      %p243 = pnand %p241, %p242
      %p244 = pneg %p243
      // Predicated region
      $region37: #{tpu_custom_call.1} parent=5 // pred_check
        _
      $region38: #{tpu_custom_call.1} parent=5 // pred_check_branch
        %246 = sbr.rel (%p243) target = $region40
      $region39: #{tpu_custom_call.1} parent=5 // pred_region
        %s247 = ssub.s32 %s19, 1
        %s248 = sand.u32 %s32, 1
        %s249 = scalar_lea.sflag [#allocation3], %s248
        %s250 = sand.u32 %s32, 1
        %s251 = smul.addr %s250, 256
        %s252 = scalar_lea.vmem [#allocation2], %s251
        // Predicated region
        $region41: #{tpu_custom_call.1} parent=39 // pred_check
          %p253 = pneg %p45
        $region42: #{tpu_custom_call.1} parent=39 // pred_check_branch
          %255 = sbr.rel (%p253) target = $region44
        $region43: #{tpu_custom_call.1} parent=39 // pred_region
          %256 = dma.done %s249, 4096
        $region44: #{tpu_custom_call.1} parent=39 // pred_fallthru
          _
        // Predicated region
        $region45: #{tpu_custom_call.1} parent=39 // pred_check
          %p257 = pneg %p66
        $region46: #{tpu_custom_call.1} parent=39 // pred_check_branch
          %259 = sbr.rel (%p257) target = $region48
        $region47: #{tpu_custom_call.1} parent=39 // pred_region
          %260 = dma.done [#allocation6], 256
        $region48: #{tpu_custom_call.1} parent=39 // pred_fallthru
          _
        // Predicated region
        $region49: #{tpu_custom_call.1} parent=39 // pred_check
          %p261 = pneg %p87
        $region50: #{tpu_custom_call.1} parent=39 // pred_check_branch
          %263 = sbr.rel (%p261) target = $region52
        $region51: #{tpu_custom_call.1} parent=39 // pred_region
          %264 = dma.done [#allocation6], 16
        $region52: #{tpu_custom_call.1} parent=39 // pred_fallthru
          _
        // Predicated region
        $region53: #{tpu_custom_call.1} parent=39 // pred_check
          %p265 = pneg %p108
        $region54: #{tpu_custom_call.1} parent=39 // pred_check_branch
          %267 = sbr.rel (%p265) target = $region56
        $region55: #{tpu_custom_call.1} parent=39 // pred_region
          %268 = dma.done [#allocation9], 64
        $region56: #{tpu_custom_call.1} parent=39 // pred_fallthru
          _
        // Predicated region
        $region57: #{tpu_custom_call.1} parent=39 // pred_check
          %p269 = pneg %p129
        $region58: #{tpu_custom_call.1} parent=39 // pred_check_branch
          %271 = sbr.rel (%p269) target = $region60
        $region59: #{tpu_custom_call.1} parent=39 // pred_region
          %272 = dma.done [#allocation9], 16
        $region60: #{tpu_custom_call.1} parent=39 // pred_fallthru
          _
        %s273 = sand.u32 %s32, 1
        %s274 = scalar_lea.sflag [#allocation3], %s273
        %s275 = sand.u32 %s32, 1
        %s276 = smul.addr %s275, 256
        %s277 = scalar_lea.vmem [#allocation2], %s276
        %p278 = pneg %p45
        %p279 = pneg %p42
        %p280 = pneg %p66
        %p281 = pneg %p63
        %p282 = pneg %p87
        %p283 = pneg %p84
        %p284 = pneg %p108
        %p285 = pneg %p105
        %p286 = pneg %p129
        %p287 = pneg %p126
        %p288 = pneg %p155
        %p289 = pneg %p152
        %s290 = sand.u32 %s142, 1
        %s291 = scalar_lea.sflag [#allocation4], %s290
        %s292 = sand.u32 %s142, 1
        %s293 = smul.addr %s292, 256
        %s294 = scalar_lea.vmem [#allocation11], %s293
        %v295 = vld [vmem:[%s252] sm:$0xff]
        %v296 = vld [vmem:[%s252 + $0x8] sm:$0xff]
        %v297 = vld [vmem:[%s252 + $0x10] sm:$0xff]
        %v298 = vld [vmem:[%s252 + $0x18] sm:$0xff]
        %v299 = vld [vmem:[%s252 + $0x20] sm:$0xff]
        %v300 = vld [vmem:[%s252 + $0x28] sm:$0xff]
        %v301 = vld [vmem:[%s252 + $0x30] sm:$0xff]
        %v302 = vld [vmem:[%s252 + $0x38] sm:$0xff]
        %v303 = vld [vmem:[%s252 + $0x40] sm:$0xff]
        %v304 = vld [vmem:[%s252 + $0x48] sm:$0xff]
        %v305 = vld [vmem:[%s252 + $0x50] sm:$0xff]
        %v306 = vld [vmem:[%s252 + $0x58] sm:$0xff]
        %v307 = vld [vmem:[%s252 + $0x60] sm:$0xff]
        %v308 = vld [vmem:[%s252 + $0x68] sm:$0xff]
        %v309 = vld [vmem:[%s252 + $0x70] sm:$0xff]
        %v310 = vld [vmem:[%s252 + $0x78] sm:$0xff]
        %v311 = vld [vmem:[%s252 + $0x80] sm:$0xff]
        %v312 = vld [vmem:[%s252 + $0x88] sm:$0xff]
        %v313 = vld [vmem:[%s252 + $0x90] sm:$0xff]
        %v314 = vld [vmem:[%s252 + $0x98] sm:$0xff]
        %v315 = vld [vmem:[%s252 + $0xa0] sm:$0xff]
        %v316 = vld [vmem:[%s252 + $0xa8] sm:$0xff]
        %v317 = vld [vmem:[%s252 + $0xb0] sm:$0xff]
        %v318 = vld [vmem:[%s252 + $0xb8] sm:$0xff]
        %v319 = vld [vmem:[%s252 + $0xc0] sm:$0xff]
        %v320 = vld [vmem:[%s252 + $0xc8] sm:$0xff]
        %v321 = vld [vmem:[%s252 + $0xd0] sm:$0xff]
        %v322 = vld [vmem:[%s252 + $0xd8] sm:$0xff]
        %v323 = vld [vmem:[%s252 + $0xe0] sm:$0xff]
        %v324 = vld [vmem:[%s252 + $0xe8] sm:$0xff]
        %v325 = vld [vmem:[%s252 + $0xf0] sm:$0xff]
        %v326 = vld [vmem:[%s252 + $0xf8] sm:$0xff]
        %vm327 = vcmask 130048
        %v328 = vsel %vm327, %v295, 0.0
        %v329 = vsel %vm327, %v296, 0.0
        %v330 = vadd.f32 %v328, %v329
        %v331 = vsel %vm327, %v297, 0.0
        %v332 = vadd.f32 %v330, %v331
        %v333 = vsel %vm327, %v298, 0.0
        %v334 = vadd.f32 %v332, %v333
        %v335 = vsel %vm327, %v299, 0.0
        %v336 = vadd.f32 %v334, %v335
        %v337 = vsel %vm327, %v300, 0.0
        %v338 = vadd.f32 %v336, %v337
        %v339 = vsel %vm327, %v301, 0.0
        %v340 = vadd.f32 %v338, %v339
        %v341 = vsel %vm327, %v302, 0.0
        %v342 = vadd.f32 %v340, %v341
        %v343 = vsel %vm327, %v303, 0.0
        %v344 = vadd.f32 %v342, %v343
        %v345 = vsel %vm327, %v304, 0.0
        %v346 = vadd.f32 %v344, %v345
        %v347 = vsel %vm327, %v305, 0.0
        %v348 = vadd.f32 %v346, %v347
        %v349 = vsel %vm327, %v306, 0.0
        %v350 = vadd.f32 %v348, %v349
        %v351 = vsel %vm327, %v307, 0.0
        %v352 = vadd.f32 %v350, %v351
        %v353 = vsel %vm327, %v308, 0.0
        %v354 = vadd.f32 %v352, %v353
        %v355 = vsel %vm327, %v309, 0.0
        %v356 = vadd.f32 %v354, %v355
        %v357 = vsel %vm327, %v310, 0.0
        %v358 = vadd.f32 %v356, %v357
        %v359 = vsel %vm327, %v311, 0.0
        %v360 = vadd.f32 %v358, %v359
        %v361 = vsel %vm327, %v312, 0.0
        %v362 = vadd.f32 %v360, %v361
        %v363 = vsel %vm327, %v313, 0.0
        %v364 = vadd.f32 %v362, %v363
        %v365 = vsel %vm327, %v314, 0.0
        %v366 = vadd.f32 %v364, %v365
        %v367 = vsel %vm327, %v315, 0.0
        %v368 = vadd.f32 %v366, %v367
        %v369 = vsel %vm327, %v316, 0.0
        %v370 = vadd.f32 %v368, %v369
        %v371 = vsel %vm327, %v317, 0.0
        %v372 = vadd.f32 %v370, %v371
        %v373 = vsel %vm327, %v318, 0.0
        %v374 = vadd.f32 %v372, %v373
        %v375 = vsel %vm327, %v319, 0.0
        %v376 = vadd.f32 %v374, %v375
        %v377 = vsel %vm327, %v320, 0.0
        %v378 = vadd.f32 %v376, %v377
        %v379 = vsel %vm327, %v321, 0.0
        %v380 = vadd.f32 %v378, %v379
        %v381 = vsel %vm327, %v322, 0.0
        %v382 = vadd.f32 %v380, %v381
        %v383 = vsel %vm327, %v323, 0.0
        %v384 = vadd.f32 %v382, %v383
        %v385 = vsel %vm327, %v324, 0.0
        %v386 = vadd.f32 %v384, %v385
        %v387 = vsel %vm327, %v325, 0.0
        %v388 = vadd.f32 %v386, %v387
        %v389 = vsel %vm327, %v326, 0.0
        %v390 = vadd.f32 %v388, %v389
        %v391 = vrot.slane %v390, 4
        %v392 = vadd.f32 %v390, %v391
        %v393 = vrot.slane %v392, 2
        %v394 = vadd.f32 %v392, %v393
        %v395 = vrot.slane %v394, 1
        %v396 = vadd.f32 %v394, %v395
        %v397 = vrcp.pop 256.0
        %v398 = vmul.f32 %v396, %v397
        %v399 = vld [vmem:[#allocation5] sm:$0xff]
        %v400 = vld [vmem:[#allocation5 + $0x8] sm:$0xff]
        %v401 = vld [vmem:[#allocation7] sm:$0x1]
        %v403 = vsel %vm327, %v398, 0
        %405 = vmatprep.subr.mxu0 0.0
        %406 = vmatpush1.msra.mxu0 %v399
        %407 = vmatprep.subr.mxu0 0.0
        %408 = vmatpush1.msra.mxu0 %v400
        %409 = vmatprep.subr.mxu0 0.0
        %410 = vmatpush1.msra.mxu0 0.0
        %411 = vmatprep.subr.mxu0 0.0
        %412 = vmatpush1.msra.mxu0 0.0
        %413 = vmatprep.subr.mxu0 0.0
        %414 = vmatpush1.msra.mxu0 0.0
        %415 = vmatprep.subr.mxu0 0.0
        %416 = vmatpush1.msra.mxu0 0.0
        %417 = vmatprep.subr.mxu0 0.0
        %418 = vmatpush1.msra.mxu0 0.0
        %419 = vmatprep.subr.mxu0 0.0
        %420 = vmatpush1.msra.mxu0 0.0
        %421 = vmatprep.subr.mxu0 0.0
        %422 = vmatpush1.msra.mxu0 0.0
        %423 = vmatprep.subr.mxu0 0.0
        %424 = vmatpush1.msra.mxu0 0.0
        %425 = vmatprep.subr.mxu0 0.0
        %426 = vmatpush1.msra.mxu0 0.0
        %427 = vmatprep.subr.mxu0 0.0
        %428 = vmatpush1.msra.mxu0 0.0
        %429 = vmatprep.subr.mxu0 0.0
        %430 = vmatpush1.msra.mxu0 0.0
        %431 = vmatprep.subr.mxu0 0.0
        %432 = vmatpush1.msra.mxu0 0.0
        %433 = vmatprep.subr.mxu0 0.0
        %434 = vmatpush1.msra.mxu0 0.0
        %435 = vmatprep.subr.mxu0 0.0
        %436 = vmatpush1.msra.mxu0 0.0
        %437 = vmatprep.subr.mxu0 0.0
        %438 = vmatpush1.msra.mxu0 0.0
        %439 = vmatprep.subr.mxu0 0.0
        %440 = vmatpush1.msra.mxu0 0.0
        %441 = vmatprep.subr.mxu0 0.0
        %442 = vmatpush1.msra.mxu0 0.0
        %443 = vmatprep.subr.mxu0 0.0
        %444 = vmatpush1.msra.mxu0 0.0
        %445 = vmatprep.subr.mxu0 0.0
        %446 = vmatpush1.msra.mxu0 0.0
        %447 = vmatprep.subr.mxu0 0.0
        %448 = vmatpush1.msra.mxu0 0.0
        %449 = vmatprep.subr.mxu0 0.0
        %450 = vmatpush1.msra.mxu0 0.0
        %451 = vmatprep.subr.mxu0 0.0
        %452 = vmatpush1.msra.mxu0 0.0
        %453 = vmatprep.subr.mxu0 0.0
        %454 = vmatpush1.msra.mxu0 0.0
        %455 = vmatprep.subr.mxu0 0.0
        %456 = vmatpush1.msra.mxu0 0.0
        %457 = vmatprep.subr.mxu0 0.0
        %458 = vmatpush1.msra.mxu0 0.0
        %459 = vmatprep.subr.mxu0 0.0
        %460 = vmatpush1.msra.mxu0 0.0
        %461 = vmatprep.subr.mxu0 0.0
        %462 = vmatpush1.msra.mxu0 0.0
        %463 = vmatprep.subr.mxu0 0.0
        %464 = vmatpush1.msra.mxu0 0.0
        %465 = vmatprep.subr.mxu0 0.0
        %466 = vmatpush1.msra.mxu0 0.0
        %467 = vmatprep.subr.mxu0 0.0
        %468 = vmatpush1.msra.mxu0 0.0
        %469 = vmatprep.mubr.f32.mxu0 0.0
        %470 = vmatmul.mubr.f32.gmra.mrb[0].mxu0 %v403
        %v471 = vpop.f32.mrb[0].mxu0
        %v472 = vadd.f32 %v401, %v471
        %v473 = vpop.f32.mrb[0].mxu0
        %474 = vdwg.mxu0
        %v475 = vmax.f32 %v472, 0.0
        %v476 = vld [vmem:[#allocation8] sm:$0xf]
        %v477 = vld [vmem:[#allocation10] sm:$0x1]
        %vm478 = vcmask 31744
        %v480 = vsel %vm478, %v475, 0
        %vm482 = vcmask 1043456
        %v484 = vsel %vm482, %v476, 0
        %486 = vmatprep.subr.mxu0 0.0
        %487 = vmatpush1.msra.mxu0 %v484
        %488 = vmatprep.subr.mxu0 0.0
        %489 = vmatpush1.msra.mxu0 0.0
        %490 = vmatprep.subr.mxu0 0.0
        %491 = vmatpush1.msra.mxu0 0.0
        %492 = vmatprep.subr.mxu0 0.0
        %493 = vmatpush1.msra.mxu0 0.0
        %494 = vmatprep.subr.mxu0 0.0
        %495 = vmatpush1.msra.mxu0 0.0
        %496 = vmatprep.subr.mxu0 0.0
        %497 = vmatpush1.msra.mxu0 0.0
        %498 = vmatprep.subr.mxu0 0.0
        %499 = vmatpush1.msra.mxu0 0.0
        %500 = vmatprep.subr.mxu0 0.0
        %501 = vmatpush1.msra.mxu0 0.0
        %502 = vmatprep.subr.mxu0 0.0
        %503 = vmatpush1.msra.mxu0 0.0
        %504 = vmatprep.subr.mxu0 0.0
        %505 = vmatpush1.msra.mxu0 0.0
        %506 = vmatprep.subr.mxu0 0.0
        %507 = vmatpush1.msra.mxu0 0.0
        %508 = vmatprep.subr.mxu0 0.0
        %509 = vmatpush1.msra.mxu0 0.0
        %510 = vmatprep.subr.mxu0 0.0
        %511 = vmatpush1.msra.mxu0 0.0
        %512 = vmatprep.subr.mxu0 0.0
        %513 = vmatpush1.msra.mxu0 0.0
        %514 = vmatprep.subr.mxu0 0.0
        %515 = vmatpush1.msra.mxu0 0.0
        %516 = vmatprep.subr.mxu0 0.0
        %517 = vmatpush1.msra.mxu0 0.0
        %518 = vmatprep.subr.mxu0 0.0
        %519 = vmatpush1.msra.mxu0 0.0
        %520 = vmatprep.subr.mxu0 0.0
        %521 = vmatpush1.msra.mxu0 0.0
        %522 = vmatprep.subr.mxu0 0.0
        %523 = vmatpush1.msra.mxu0 0.0
        %524 = vmatprep.subr.mxu0 0.0
        %525 = vmatpush1.msra.mxu0 0.0
        %526 = vmatprep.subr.mxu0 0.0
        %527 = vmatpush1.msra.mxu0 0.0
        %528 = vmatprep.subr.mxu0 0.0
        %529 = vmatpush1.msra.mxu0 0.0
        %530 = vmatprep.subr.mxu0 0.0
        %531 = vmatpush1.msra.mxu0 0.0
        %532 = vmatprep.subr.mxu0 0.0
        %533 = vmatpush1.msra.mxu0 0.0
        %534 = vmatprep.subr.mxu0 0.0
        %535 = vmatpush1.msra.mxu0 0.0
        %536 = vmatprep.subr.mxu0 0.0
        %537 = vmatpush1.msra.mxu0 0.0
        %538 = vmatprep.subr.mxu0 0.0
        %539 = vmatpush1.msra.mxu0 0.0
        %540 = vmatprep.subr.mxu0 0.0
        %541 = vmatpush1.msra.mxu0 0.0
        %542 = vmatprep.subr.mxu0 0.0
        %543 = vmatpush1.msra.mxu0 0.0
        %544 = vmatprep.subr.mxu0 0.0
        %545 = vmatpush1.msra.mxu0 0.0
        %546 = vmatprep.subr.mxu0 0.0
        %547 = vmatpush1.msra.mxu0 0.0
        %548 = vmatprep.subr.mxu0 0.0
        %549 = vmatpush1.msra.mxu0 0.0
        %550 = vmatprep.mubr.f32.mxu0 0.0
        %551 = vmatmul.mubr.f32.gmra.mrb[0].mxu0 %v480
        %v552 = vpop.f32.mrb[0].mxu0
        %v553 = vadd.f32 %v477, %v552
        %v554 = vpop.f32.mrb[0].mxu0
        %555 = vdwg.mxu0
        %v556 = vxor.u32 %v553, 2147483648
        %v557 = vmul.f32 %v556, 1.442695
        %v558 = vpow.pop %v557
        %v559 = vadd.f32 %v558, 1.0
        %v560 = vrcp.pop %v559
        %v561 = vmul.f32 1.0, %v560
        %v562 = vlaneseq
        %v563 = vshrl.u32 %v562, 7
        %v564 = vsub.s32 0, %v563
        %v565 = vrot.slane %v561, %v564
        %v566 = vmul.f32 %v295, %v565
        %v567 = vmul.f32 %v296, %v565
        %v568 = vmul.f32 %v297, %v565
        %v569 = vmul.f32 %v298, %v565
        %v570 = vmul.f32 %v299, %v565
        %v571 = vmul.f32 %v300, %v565
        %v572 = vmul.f32 %v301, %v565
        %v573 = vmul.f32 %v302, %v565
        %v574 = vmul.f32 %v303, %v565
        %v575 = vmul.f32 %v304, %v565
        %v576 = vmul.f32 %v305, %v565
        %v577 = vmul.f32 %v306, %v565
        %v578 = vmul.f32 %v307, %v565
        %v579 = vmul.f32 %v308, %v565
        %v580 = vmul.f32 %v309, %v565
        %v581 = vmul.f32 %v310, %v565
        %v582 = vmul.f32 %v311, %v565
        %v583 = vmul.f32 %v312, %v565
        %v584 = vmul.f32 %v313, %v565
        %v585 = vmul.f32 %v314, %v565
        %v586 = vmul.f32 %v315, %v565
        %v587 = vmul.f32 %v316, %v565
        %v588 = vmul.f32 %v317, %v565
        %v589 = vmul.f32 %v318, %v565
        %v590 = vmul.f32 %v319, %v565
        %v591 = vmul.f32 %v320, %v565
        %v592 = vmul.f32 %v321, %v565
        %v593 = vmul.f32 %v322, %v565
        %v594 = vmul.f32 %v323, %v565
        %v595 = vmul.f32 %v324, %v565
        %v596 = vmul.f32 %v325, %v565
        %v597 = vmul.f32 %v326, %v565
        %598 = vst.msk [vmem:[%s294] sm:$0xff] %vm327, %v566
        %599 = vst.msk [vmem:[%s294 + $0x8] sm:$0xff] %vm327, %v567
        %600 = vst.msk [vmem:[%s294 + $0x10] sm:$0xff] %vm327, %v568
        %601 = vst.msk [vmem:[%s294 + $0x18] sm:$0xff] %vm327, %v569
        %602 = vst.msk [vmem:[%s294 + $0x20] sm:$0xff] %vm327, %v570
        %603 = vst.msk [vmem:[%s294 + $0x28] sm:$0xff] %vm327, %v571
        %604 = vst.msk [vmem:[%s294 + $0x30] sm:$0xff] %vm327, %v572
        %605 = vst.msk [vmem:[%s294 + $0x38] sm:$0xff] %vm327, %v573
        %606 = vst.msk [vmem:[%s294 + $0x40] sm:$0xff] %vm327, %v574
        %607 = vst.msk [vmem:[%s294 + $0x48] sm:$0xff] %vm327, %v575
        %608 = vst.msk [vmem:[%s294 + $0x50] sm:$0xff] %vm327, %v576
        %609 = vst.msk [vmem:[%s294 + $0x58] sm:$0xff] %vm327, %v577
        %610 = vst.msk [vmem:[%s294 + $0x60] sm:$0xff] %vm327, %v578
        %611 = vst.msk [vmem:[%s294 + $0x68] sm:$0xff] %vm327, %v579
        %612 = vst.msk [vmem:[%s294 + $0x70] sm:$0xff] %vm327, %v580
        %613 = vst.msk [vmem:[%s294 + $0x78] sm:$0xff] %vm327, %v581
        %614 = vst.msk [vmem:[%s294 + $0x80] sm:$0xff] %vm327, %v582
        %615 = vst.msk [vmem:[%s294 + $0x88] sm:$0xff] %vm327, %v583
        %616 = vst.msk [vmem:[%s294 + $0x90] sm:$0xff] %vm327, %v584
        %617 = vst.msk [vmem:[%s294 + $0x98] sm:$0xff] %vm327, %v585
        %618 = vst.msk [vmem:[%s294 + $0xa0] sm:$0xff] %vm327, %v586
        %619 = vst.msk [vmem:[%s294 + $0xa8] sm:$0xff] %vm327, %v587
        %620 = vst.msk [vmem:[%s294 + $0xb0] sm:$0xff] %vm327, %v588
        %621 = vst.msk [vmem:[%s294 + $0xb8] sm:$0xff] %vm327, %v589
        %622 = vst.msk [vmem:[%s294 + $0xc0] sm:$0xff] %vm327, %v590
        %623 = vst.msk [vmem:[%s294 + $0xc8] sm:$0xff] %vm327, %v591
        %624 = vst.msk [vmem:[%s294 + $0xd0] sm:$0xff] %vm327, %v592
        %625 = vst.msk [vmem:[%s294 + $0xd8] sm:$0xff] %vm327, %v593
        %626 = vst.msk [vmem:[%s294 + $0xe0] sm:$0xff] %vm327, %v594
        %627 = vst.msk [vmem:[%s294 + $0xe8] sm:$0xff] %vm327, %v595
        %628 = vst.msk [vmem:[%s294 + $0xf0] sm:$0xff] %vm327, %v596
        %629 = vst.msk [vmem:[%s294 + $0xf8] sm:$0xff] %vm327, %v597
        %s630 = sand.u32 %s142, 1
        %s631 = scalar_lea.sflag [#allocation4], %s630
        %s632 = sand.u32 %s142, 1
        %s633 = smul.addr %s632, 256
        %s634 = scalar_lea.vmem [#allocation11], %s633
        // Predicated region
        $region61: #{tpu_custom_call.1} parent=39 // pred_check
          %p635 = pneg %p152
        $region62: #{tpu_custom_call.1} parent=39 // pred_check_branch
          %637 = sbr.rel (%p635) target = $region64
        $region63: #{tpu_custom_call.1} parent=39 // pred_region
          %s639 = ssub.s32 4096, 4096
          %640 = vsyncadd %s631, %s639
          %s641 = smul.addr %s24, 32
          %s642 = smul.addr %s641, 128
          %s643 = scalar_lea.hbm %s5, %s642
          %s644 = sshll.u32 %s634, 4
          %s645 = int_to_ptr.vmem [resolvable:$true] %s644
          %650 = dma.vmem_to_hbm [thread:$0]  %s645, 4096, %s643, %s631, 128, 128, 8
        $region64: #{tpu_custom_call.1} parent=39 // pred_fallthru
          _
      $region40: #{tpu_custom_call.1} parent=5 // pred_fallthru
        _
      %p651 = scmp.le.s32.totalorder 2, %s19
      // Predicated region
      $region65: #{tpu_custom_call.1} parent=5 // pred_check
        %p652 = pneg %p651
      $region66: #{tpu_custom_call.1} parent=5 // pred_check_branch
        %654 = sbr.rel (%p652) target = $region68
      $region67: #{tpu_custom_call.1} parent=5 // pred_region
        %s655 = ssub.s32 %s19, 2
        // Predicated region
        $region69: #{tpu_custom_call.1} parent=67 // pred_check
          %p656 = pneg %p158
        $region70: #{tpu_custom_call.1} parent=67 // pred_check_branch
          %658 = sbr.rel (%p656) target = $region72
        $region71: #{tpu_custom_call.1} parent=67 // pred_region
          %s659 = sand.u32 %s143, 1
          %s660 = scalar_lea.sflag [#allocation4], %s659
          %s661 = sand.u32 %s143, 1
          %s662 = smul.addr %s661, 256
          %s663 = scalar_lea.vmem [#allocation11], %s662
          %664 = dma.done %s660, 4096
        $region72: #{tpu_custom_call.1} parent=67 // pred_fallthru
          _
      $region68: #{tpu_custom_call.1} parent=5 // pred_fallthru
        _
    $region6: #{tpu_custom_call.1} parent=1 // loop_footer
      %s23 = sadd.s32 1, %s19
    $region7: #{tpu_custom_call.1} parent=1 // loop_footer_branch
      %18 = sbr.rel target = $region3
    $region8: #{tpu_custom_call.1} parent=1 // loop_exit
      _
    %665 = vsyncpa [#allocation3], 1
    %s666 = scalar_lea.sflag [#allocation3], 1
    %667 = vsyncpa %s666, 1
    %668 = vsyncpa [#allocation6], 1
    %669 = vsyncpa [#allocation9], 1
    %670 = vsyncpa [#allocation4], 1
    %s671 = scalar_lea.sflag [#allocation4], 1
    %672 = vsyncpa %s671, 1

</llo_original>
